<compile_context>
chip_gen: v7x
topology: tpu7x:2x2x1
jax: 0.10.0
libtpu: 0.0.40
codegen_flags: <defaults>
</compile_context>

<pallas_src>
import functools

import jax
import jax.numpy as jnp
from jax.experimental import pallas as pl
from jax.experimental.pallas import tpu as pltpu

MEAN = 0.1307
SIGMA = 0.3081
NORM_A = 1.0 / SIGMA      # scale
NORM_B = -MEAN / SIGMA    # offset:  (x - mean)/sigma == x*NORM_A + NORM_B


def _spu(x):
    # spu(x) = x > 0 ? x^2 - 0.5 : sigmoid(-x) - 1
    return jnp.where(x > 0, x * x - 0.5, 1.0 / (1.0 + jnp.exp(x)) - 1.0)


def _fused_linear_kernel(x_ref, w_ref, b_ref, o_ref, acc_ref, *,
                         apply_norm: bool, apply_spu: bool):
    k = pl.program_id(2)

    @pl.when(k == 0)
    def _():
        acc_ref[...] = jnp.zeros_like(acc_ref)

    x = x_ref[...].astype(jnp.float32)
    if apply_norm:
        # Normalization fused into the first layer's input tile (one VPU FMA).
        x = x * NORM_A + NORM_B

    acc_ref[...] += jnp.dot(x, w_ref[...].astype(jnp.float32),
                            preferred_element_type=jnp.float32)

    @pl.when(k == pl.num_programs(2) - 1)
    def _():
        out = acc_ref[...] + b_ref[...]
        if apply_spu:
            out = _spu(out)
        o_ref[...] = out.astype(o_ref.dtype)


def _round_up(x, m):
    return (x + m - 1) // m * m


def fused_linear(x, w, b, *, apply_norm=False, apply_spu=False):
    """out = spu?((norm?(x)) @ w + b) as a tiled Pallas matmul."""
    M, K = x.shape
    K2, N = w.shape
    assert K == K2 and b.shape == (N,)

    # Sublane-aligned M tile, lane-aligned (multiple-of-128) K/N tiles.
    # Max per-buffer size 256*512*4 = 512 KiB -> comfortably inside the
    # scoped-VMEM budget of every generation (v5e 16 MiB, v7x 32 MiB) even
    # with double buffering of all operands.
    tm = min(_round_up(M, 8), 256)
    tk = min(_round_up(K, 128), 512)
    tn = min(_round_up(N, 128), 512)
    Mp, Kp, Np = _round_up(M, tm), _round_up(K, tk), _round_up(N, tn)

    # Zero-pad to tile multiples (padded weight rows/cols are zero, so padded
    # input columns contribute nothing; padded output rows/cols are sliced off).
    xp = jnp.pad(x, ((0, Mp - M), (0, Kp - K)))
    wp = jnp.pad(w, ((0, Kp - K), (0, Np - N)))
    bp = jnp.pad(b, ((0, Np - N),)).reshape(1, Np)

    kernel = functools.partial(_fused_linear_kernel,
                               apply_norm=apply_norm, apply_spu=apply_spu)

    out = pl.pallas_call(
        kernel,
        out_shape=jax.ShapeDtypeStruct((Mp, Np), x.dtype),
        grid_spec=pltpu.PrefetchScalarGridSpec(
            num_scalar_prefetch=0,
            grid=(Mp // tm, Np // tn, Kp // tk),
            in_specs=[
                pl.BlockSpec((tm, tk), lambda i, j, k: (i, k)),   # activations
                pl.BlockSpec((tk, tn), lambda i, j, k: (k, j)),   # weights
                pl.BlockSpec((1, tn), lambda i, j, k: (0, j)),    # bias row
            ],
            out_specs=pl.BlockSpec((tm, tn), lambda i, j, k: (i, j)),
            scratch_shapes=[pltpu.VMEM((tm, tn), jnp.float32)],
        ),
        compiler_params=pltpu.CompilerParams(
            # M/N tiles are independent -> megacore-shardable; K is a reduction.
            dimension_semantics=("parallel", "parallel", "arbitrary")),
    )(xp, wp, bp)
    return out[:M, :N]


def fully_connected_forward(x, weights, biases):
    """Pallas forward of FullyConnected.

    Normalization is a scalar affine op, so it commutes with Flatten and is
    fused into the first matmul kernel; SPU is fused into each non-final
    matmul's epilogue.
    """
    h = x.reshape(x.shape[0], -1)          # nn.Flatten
    n_layers = len(weights)
    for i, (w, b) in enumerate(zip(weights, biases)):
        h = fused_linear(h, w, b,
                         apply_norm=(i == 0),
                         apply_spu=(i + 1 < n_layers))
    return h


def _reference_forward(x, weights, biases):
    """Pure-JAX reference (HIGHEST precision matmuls)."""
    h = ((x - MEAN) / SIGMA).reshape(x.shape[0], -1)
    n_layers = len(weights)
    for i, (w, b) in enumerate(zip(weights, biases)):
        h = jnp.dot(h, w, precision=jax.lax.Precision.HIGHEST) + b
        if i + 1 < n_layers:
            h = jnp.where(h > 0, h * h - 0.5, jax.nn.sigmoid(-h) - 1.0)
    return h


if __name__ == "__main__":
    key = jax.random.PRNGKey(0)
    # Shapes consistent with the module: 1 channel so Flatten gives
    # input_size*input_size features for the first Linear.
    batch, channels, input_size = 2, 1, 16
    fc_layers = [64, 32, 10]

    kx, *kws = jax.random.split(key, 1 + 2 * len(fc_layers))
    x = jax.random.uniform(kx, (batch, channels, input_size, input_size),
                           dtype=jnp.float32)

    # nn.Linear-style init: U(-1/sqrt(fan_in), 1/sqrt(fan_in)); weights stored
    # as (in_features, out_features) so the kernel computes h @ W + b.
    weights, biases = [], []
    prev = input_size * input_size
    for i, fc in enumerate(fc_layers):
        bound = 1.0 / (prev ** 0.5)
        w = jax.random.uniform(kws[2 * i], (prev, fc), jnp.float32, -bound, bound)
        b = jax.random.uniform(kws[2 * i + 1], (fc,), jnp.float32, -bound, bound)
        weights.append(w)
        biases.append(b)
        prev = fc

    out = fully_connected_forward(x, weights, biases)
    out = jax.block_until_ready(out)

    ref = _reference_forward(x, weights, biases)
    assert out.shape == (batch, fc_layers[-1])
    # Loose-ish tolerance: MXU default-precision f32 matmuls may differ from
    # the HIGHEST-precision XLA reference at the ~1e-3 level across 3 layers.
    assert jnp.allclose(out, ref, atol=2e-2, rtol=2e-2), "mismatch vs reference"

    print("KERNEL_OK")
</pallas_src>

<mosaic_0001>
module attributes {stable_mosaic.version = 11 : i64} {
  func.func @_fused_linear_kernel(%arg0: i32, %arg1: i32, %arg2: i32, %arg3: memref<8x256xf32, #tpu.memory_space<vmem>>, %arg4: memref<256x128xf32, #tpu.memory_space<vmem>>, %arg5: memref<1x128xf32, #tpu.memory_space<vmem>>, %arg6: memref<8x128xf32, #tpu.memory_space<vmem>>, %arg7: memref<8x128xf32, #tpu.memory_space<vmem>>) attributes {dimension_semantics = [#tpu.dimension_semantics<parallel>, #tpu.dimension_semantics<parallel>, #tpu.dimension_semantics<arbitrary>], iteration_bounds = array<i64: 1, 1, 1>, scalar_prefetch = 0 : i64, scratch_operands = 1 : i64, tpu.core_type = #tpu.core_type<tc>, window_params = [{transform_indices = @transform_0, window_bounds = array<i64: 8, 256>}, {transform_indices = @transform_1, window_bounds = array<i64: 256, 128>}, {transform_indices = @transform_2, window_bounds = array<i64: 1, 128>}, {transform_indices = @transform_3, window_bounds = array<i64: 8, 128>}]} {
    %c0_i32 = arith.constant 0 : i32
    %0 = arith.cmpi eq, %arg2, %c0_i32 : i32
    %1 = arith.extui %0 : i1 to i32
    %c0_i32_0 = arith.constant 0 : i32
    %2 = arith.cmpi ne, %1, %c0_i32_0 : i32
    scf.if %2 {
      %cst_12 = arith.constant 0.000000e+00 : f32
      %16 = vector.broadcast %cst_12 : f32 to vector<8x128xf32>
      %c0_13 = arith.constant 0 : index
      %c0_14 = arith.constant 0 : index
      %17 = vector.load %arg7[%c0_13, %c0_14] : memref<8x128xf32, #tpu.memory_space<vmem>>, vector<8x128xf32>
      tpu.vector_store %arg7[%c0_13, %c0_14], %16 {strides = array<i32>} : memref<8x128xf32, #tpu.memory_space<vmem>>, vector<8x128xf32>,
    } else {
    }
    %c0 = arith.constant 0 : index
    %c0_1 = arith.constant 0 : index
    %3 = vector.load %arg3[%c0, %c0_1] : memref<8x256xf32, #tpu.memory_space<vmem>>, vector<8x256xf32>
    %cst = arith.constant 3.24569941 : f32
    %4 = vector.broadcast %cst : f32 to vector<8x256xf32>
    %5 = arith.mulf %3, %4 : vector<8x256xf32>
    %cst_2 = arith.constant -0.424212933 : f32
    %6 = vector.broadcast %cst_2 : f32 to vector<8x256xf32>
    %7 = arith.addf %5, %6 : vector<8x256xf32>
    %c0_3 = arith.constant 0 : index
    %c0_4 = arith.constant 0 : index
    %8 = vector.load %arg7[%c0_3, %c0_4] : memref<8x128xf32, #tpu.memory_space<vmem>>, vector<8x128xf32>
    %c0_5 = arith.constant 0 : index
    %c0_6 = arith.constant 0 : index
    %9 = vector.load %arg4[%c0_5, %c0_6] : memref<256x128xf32, #tpu.memory_space<vmem>>, vector<256x128xf32>
    %cst_7 = arith.constant dense<0.000000e+00> : vector<8x128xf32>
    %10 = tpu.matmul %7, %9, %cst_7 {dimension_numbers = #tpu.dot_dimension_numbers<[1], [0], [0], [1], [0, 0, 1, 1], [], []>} : vector<8x256xf32>, vector<256x128xf32>, vector<8x128xf32> -> vector<8x128xf32>
    %11 = arith.addf %8, %10 : vector<8x128xf32>
    %c0_8 = arith.constant 0 : index
    %c0_9 = arith.constant 0 : index
    %12 = vector.load %arg7[%c0_8, %c0_9] : memref<8x128xf32, #tpu.memory_space<vmem>>, vector<8x128xf32>
    tpu.vector_store %arg7[%c0_8, %c0_9], %11 {strides = array<i32>} : memref<8x128xf32, #tpu.memory_space<vmem>>, vector<8x128xf32>,
    %c0_i32_10 = arith.constant 0 : i32
    %13 = arith.cmpi eq, %arg2, %c0_i32_10 : i32
    %14 = arith.extui %13 : i1 to i32
    %c0_i32_11 = arith.constant 0 : i32
    %15 = arith.cmpi ne, %14, %c0_i32_11 : i32
    scf.if %15 {
      %c0_12 = arith.constant 0 : index
      %c0_13 = arith.constant 0 : index
      %16 = vector.load %arg7[%c0_12, %c0_13] : memref<8x128xf32, #tpu.memory_space<vmem>>, vector<8x128xf32>
      %c0_14 = arith.constant 0 : index
      %c0_15 = arith.constant 0 : index
      %17 = vector.load %arg5[%c0_14, %c0_15] : memref<1x128xf32, #tpu.memory_space<vmem>>, vector<1x128xf32>
      %18 = vector.broadcast %17 : vector<1x128xf32> to vector<8x128xf32>
      %19 = arith.addf %16, %18 : vector<8x128xf32>
      %cst_16 = arith.constant 0.000000e+00 : f32
      %20 = vector.broadcast %cst_16 : f32 to vector<8x128xf32>
      %21 = arith.cmpf ogt, %19, %20 : vector<8x128xf32>
      %22 = arith.mulf %19, %19 : vector<8x128xf32>
      %cst_17 = arith.constant 5.000000e-01 : f32
      %23 = vector.broadcast %cst_17 : f32 to vector<8x128xf32>
      %24 = arith.subf %22, %23 : vector<8x128xf32>
      %25 = math.exp %19 : vector<8x128xf32>
      %cst_18 = arith.constant 1.000000e+00 : f32
      %26 = vector.broadcast %cst_18 : f32 to vector<8x128xf32>
      %27 = arith.addf %26, %25 : vector<8x128xf32>
      %cst_19 = arith.constant 1.000000e+00 : f32
      %28 = vector.broadcast %cst_19 : f32 to vector<8x128xf32>
      %29 = arith.divf %28, %27 : vector<8x128xf32>
      %cst_20 = arith.constant 1.000000e+00 : f32
      %30 = vector.broadcast %cst_20 : f32 to vector<8x128xf32>
      %31 = arith.subf %29, %30 : vector<8x128xf32>
      %32 = arith.select %21, %24, %31 : vector<8x128xi1>, vector<8x128xf32>
      %c0_21 = arith.constant 0 : index
      %c0_22 = arith.constant 0 : index
      %33 = vector.load %arg6[%c0_21, %c0_22] : memref<8x128xf32, #tpu.memory_space<vmem>>, vector<8x128xf32>
      tpu.vector_store %arg6[%c0_21, %c0_22], %32 {strides = array<i32>} : memref<8x128xf32, #tpu.memory_space<vmem>>, vector<8x128xf32>,
    } else {
    }
    return
  }
  func.func @transform_0(%arg0: i32, %arg1: i32, %arg2: i32) -> (i32, i32) {
    %c0_i32 = arith.constant 0 : i32
    return %arg0, %arg2 : i32, i32
  }
  func.func @transform_1(%arg0: i32, %arg1: i32, %arg2: i32) -> (i32, i32) {
    %c0_i32 = arith.constant 0 : i32
    return %arg2, %arg1 : i32, i32
  }
  func.func @transform_2(%arg0: i32, %arg1: i32, %arg2: i32) -> (i32, i32) {
    %c0_i32 = arith.constant 0 : i32
    %c0_i32_0 = arith.constant 0 : i32
    return %c0_i32, %arg1 : i32, i32
  }
  func.func @transform_3(%arg0: i32, %arg1: i32, %arg2: i32) -> (i32, i32) {
    %c0_i32 = arith.constant 0 : i32
    return %arg0, %arg1 : i32, i32
  }
}

</mosaic_0001>

<llo_original>
// kernel: tpu_custom_call.1
$region0: #{tpu_custom_call.1}
  #allocation0 [shape = 'u32[]', space=smem, size = 0x4, offset = 0x4, fixed_abs, tag = 'smem constant byte address 0x4 - core index']
  #allocation1 [shape = 'u32[144,128]{1,0:T(1,128)}', space=vmem, size = 0x12000, scoped, tag = 'internal scratch']
  #allocation2 [shape = 'f32[8,128]{1,0:T(8,128)}', space=vmem, size = 0x1000, scoped, tag = 'scratch operand']
  %s0 = inlined_call_operand.hbm [shape: f32[8,256], index: 0, kind: input, shape index: {}]
  %s1 = inlined_call_operand.hbm [shape: f32[256,128], index: 1, kind: input, shape index: {}]
  %s2 = inlined_call_operand.vmem [shape: f32[1,128], index: 2, kind: input, shape index: {}]
  %s3 = inlined_call_operand.hbm [shape: f32[8,128], index: 3, kind: output, shape index: {}]
  %s4 = sld [smem:[#allocation0]]
  $region38: #{tpu_custom_call.1} parent=0
    _
  %s6 = ssub.s32 1, %s4
  %s7 = scalar_select 0, %s6, %s4
  $region1: #{tpu_custom_call.1} parent=0
    #allocation3 [shape = 'u8[8192]{0}', space=vmem, size = 0x2000, scoped, tag = 'input window, operand 0, single buffered']
    #allocation4 [shape = 's32[1]{0}', space=sflag, size = 0x4, scoped, tag = 'scoped memory for tpu_custom_call.1']
    #allocation5 [shape = 's32[1]{0}', space=sflag, size = 0x4, scoped, tag = 'scoped memory for tpu_custom_call.1']
    #allocation6 [shape = 'u8[131072]{0}', space=vmem, size = 0x20000, scoped, tag = 'input window, operand 1, single buffered']
    #allocation7 [shape = 's32[1]{0}', space=sflag, size = 0x4, scoped, tag = 'scoped memory for tpu_custom_call.1']
    #allocation8 [shape = 'u8[4096]{0}', space=vmem, size = 0x1000, scoped, tag = 'output window, operand 0, single buffered']
    %8 = vsyncpa [#allocation4], 0
    %9 = vsyncpa [#allocation7], 0
    %10 = vsyncpa [#allocation5], 0
    // Predicated region
    $region2: #{tpu_custom_call.1} parent=1 // pred_check
      _
    $region3: #{tpu_custom_call.1} parent=1 // pred_check_branch
      %12 = sbr.rel (0) target = $region5
    $region4: #{tpu_custom_call.1} parent=1 // pred_region
      %s14 = ssub.s32 256, 256
      %15 = vsyncadd [#allocation4], %s14
      %s17 = sshll.u32 [#allocation3], 4
      %s18 = int_to_ptr.vmem [resolvable:$true] %s17
      %20 = dma.hbm_to_vmem [thread:$0]  %s0, 256, %s18, [#allocation4]
    $region5: #{tpu_custom_call.1} parent=1 // pred_fallthru
      _
    // Predicated region
    $region6: #{tpu_custom_call.1} parent=1 // pred_check
      _
    $region7: #{tpu_custom_call.1} parent=1 // pred_check_branch
      %22 = sbr.rel (0) target = $region9
    $region8: #{tpu_custom_call.1} parent=1 // pred_region
      %s24 = ssub.s32 4096, 4096
      %25 = vsyncadd [#allocation7], %s24
      %s26 = sshll.u32 [#allocation6], 4
      %s27 = int_to_ptr.vmem [resolvable:$true] %s26
      %32 = dma.hbm_to_vmem [thread:$0]  %s1, 4096, %s27, [#allocation7], 128, 128, 8
    $region9: #{tpu_custom_call.1} parent=1 // pred_fallthru
      _
    // Predicated region
    $region10: #{tpu_custom_call.1} parent=1 // pred_check
      _
    $region11: #{tpu_custom_call.1} parent=1 // pred_check_branch
      %34 = sbr.rel (0) target = $region13
    $region12: #{tpu_custom_call.1} parent=1 // pred_region
      _
    $region13: #{tpu_custom_call.1} parent=1 // pred_fallthru
      _
    // Predicated region
    $region14: #{tpu_custom_call.1} parent=1 // pred_check
      _
    $region15: #{tpu_custom_call.1} parent=1 // pred_check_branch
      %36 = sbr.rel (0) target = $region17
    $region16: #{tpu_custom_call.1} parent=1 // pred_region
      %37 = dma.done [#allocation4], 256
    $region17: #{tpu_custom_call.1} parent=1 // pred_fallthru
      _
    // Predicated region
    $region18: #{tpu_custom_call.1} parent=1 // pred_check
      _
    $region19: #{tpu_custom_call.1} parent=1 // pred_check_branch
      %39 = sbr.rel (0) target = $region21
    $region20: #{tpu_custom_call.1} parent=1 // pred_region
      %40 = dma.done [#allocation7], 4096
    $region21: #{tpu_custom_call.1} parent=1 // pred_fallthru
      _
    %p41 = scmp.eq.s32.totalorder 0, 0
    // Predicated region
    $region22: #{tpu_custom_call.1} parent=1 // pred_check
      %p42 = pneg %p41
    $region23: #{tpu_custom_call.1} parent=1 // pred_check_branch
      %44 = sbr.rel (%p42) target = $region25
    $region24: #{tpu_custom_call.1} parent=1 // pred_region
      %45 = vst [vmem:[#allocation2] sm:$0xff] 0.0
    $region25: #{tpu_custom_call.1} parent=1 // pred_fallthru
      _
    %v46 = vld [vmem:[#allocation3] sm:$0xff]
    %v47 = vld [vmem:[#allocation3 + $0x8] sm:$0xff]
    %v48 = vmul.f32 %v46, 3.2456994
    %v49 = vmul.f32 %v47, 3.2456994
    %v50 = vadd.f32 %v48, -0.42421293
    %v51 = vadd.f32 %v49, -0.42421293
    %v52 = vld [vmem:[#allocation2] sm:$0xff]
    %v53 = vld [vmem:[#allocation6] sm:$0xff]
    %v54 = vld [vmem:[#allocation6 + $0x8] sm:$0xff]
    %v55 = vld [vmem:[#allocation6 + $0x10] sm:$0xff]
    %v56 = vld [vmem:[#allocation6 + $0x18] sm:$0xff]
    %v57 = vld [vmem:[#allocation6 + $0x20] sm:$0xff]
    %v58 = vld [vmem:[#allocation6 + $0x28] sm:$0xff]
    %v59 = vld [vmem:[#allocation6 + $0x30] sm:$0xff]
    %v60 = vld [vmem:[#allocation6 + $0x38] sm:$0xff]
    %v61 = vld [vmem:[#allocation6 + $0x40] sm:$0xff]
    %v62 = vld [vmem:[#allocation6 + $0x48] sm:$0xff]
    %v63 = vld [vmem:[#allocation6 + $0x50] sm:$0xff]
    %v64 = vld [vmem:[#allocation6 + $0x58] sm:$0xff]
    %v65 = vld [vmem:[#allocation6 + $0x60] sm:$0xff]
    %v66 = vld [vmem:[#allocation6 + $0x68] sm:$0xff]
    %v67 = vld [vmem:[#allocation6 + $0x70] sm:$0xff]
    %v68 = vld [vmem:[#allocation6 + $0x78] sm:$0xff]
    %v69 = vld [vmem:[#allocation6 + $0x80] sm:$0xff]
    %v70 = vld [vmem:[#allocation6 + $0x88] sm:$0xff]
    %v71 = vld [vmem:[#allocation6 + $0x90] sm:$0xff]
    %v72 = vld [vmem:[#allocation6 + $0x98] sm:$0xff]
    %v73 = vld [vmem:[#allocation6 + $0xa0] sm:$0xff]
    %v74 = vld [vmem:[#allocation6 + $0xa8] sm:$0xff]
    %v75 = vld [vmem:[#allocation6 + $0xb0] sm:$0xff]
    %v76 = vld [vmem:[#allocation6 + $0xb8] sm:$0xff]
    %v77 = vld [vmem:[#allocation6 + $0xc0] sm:$0xff]
    %v78 = vld [vmem:[#allocation6 + $0xc8] sm:$0xff]
    %v79 = vld [vmem:[#allocation6 + $0xd0] sm:$0xff]
    %v80 = vld [vmem:[#allocation6 + $0xd8] sm:$0xff]
    %v81 = vld [vmem:[#allocation6 + $0xe0] sm:$0xff]
    %v82 = vld [vmem:[#allocation6 + $0xe8] sm:$0xff]
    %v83 = vld [vmem:[#allocation6 + $0xf0] sm:$0xff]
    %v84 = vld [vmem:[#allocation6 + $0xf8] sm:$0xff]
    %85 = vmatprep.subr.mxu0 0.0
    %86 = vmatpush1.msra.mxu0 %v53
    %87 = vmatprep.subr.mxu0 0.0
    %88 = vmatpush1.msra.mxu0 %v54
    %89 = vmatprep.subr.mxu0 0.0
    %90 = vmatpush1.msra.mxu0 %v55
    %91 = vmatprep.subr.mxu0 0.0
    %92 = vmatpush1.msra.mxu0 %v56
    %93 = vmatprep.subr.mxu0 0.0
    %94 = vmatpush1.msra.mxu0 %v57
    %95 = vmatprep.subr.mxu0 0.0
    %96 = vmatpush1.msra.mxu0 %v58
    %97 = vmatprep.subr.mxu0 0.0
    %98 = vmatpush1.msra.mxu0 %v59
    %99 = vmatprep.subr.mxu0 0.0
    %100 = vmatpush1.msra.mxu0 %v60
    %101 = vmatprep.subr.mxu0 0.0
    %102 = vmatpush1.msra.mxu0 %v61
    %103 = vmatprep.subr.mxu0 0.0
    %104 = vmatpush1.msra.mxu0 %v62
    %105 = vmatprep.subr.mxu0 0.0
    %106 = vmatpush1.msra.mxu0 %v63
    %107 = vmatprep.subr.mxu0 0.0
    %108 = vmatpush1.msra.mxu0 %v64
    %109 = vmatprep.subr.mxu0 0.0
    %110 = vmatpush1.msra.mxu0 %v65
    %111 = vmatprep.subr.mxu0 0.0
    %112 = vmatpush1.msra.mxu0 %v66
    %113 = vmatprep.subr.mxu0 0.0
    %114 = vmatpush1.msra.mxu0 %v67
    %115 = vmatprep.subr.mxu0 0.0
    %116 = vmatpush1.msra.mxu0 %v68
    %117 = vmatprep.subr.mxu0 0.0
    %118 = vmatpush1.msra.mxu0 %v69
    %119 = vmatprep.subr.mxu0 0.0
    %120 = vmatpush1.msra.mxu0 %v70
    %121 = vmatprep.subr.mxu0 0.0
    %122 = vmatpush1.msra.mxu0 %v71
    %123 = vmatprep.subr.mxu0 0.0
    %124 = vmatpush1.msra.mxu0 %v72
    %125 = vmatprep.subr.mxu0 0.0
    %126 = vmatpush1.msra.mxu0 %v73
    %127 = vmatprep.subr.mxu0 0.0
    %128 = vmatpush1.msra.mxu0 %v74
    %129 = vmatprep.subr.mxu0 0.0
    %130 = vmatpush1.msra.mxu0 %v75
    %131 = vmatprep.subr.mxu0 0.0
    %132 = vmatpush1.msra.mxu0 %v76
    %133 = vmatprep.subr.mxu0 0.0
    %134 = vmatpush1.msra.mxu0 %v77
    %135 = vmatprep.subr.mxu0 0.0
    %136 = vmatpush1.msra.mxu0 %v78
    %137 = vmatprep.subr.mxu0 0.0
    %138 = vmatpush1.msra.mxu0 %v79
    %139 = vmatprep.subr.mxu0 0.0
    %140 = vmatpush1.msra.mxu0 %v80
    %141 = vmatprep.subr.mxu0 0.0
    %142 = vmatpush1.msra.mxu0 %v81
    %143 = vmatprep.subr.mxu0 0.0
    %144 = vmatpush1.msra.mxu0 %v82
    %145 = vmatprep.subr.mxu0 0.0
    %146 = vmatpush1.msra.mxu0 %v83
    %147 = vmatprep.subr.mxu0 0.0
    %148 = vmatpush1.msra.mxu0 %v84
    %149 = vmatprep.mubr.f32.mxu0 %v51
    %150 = vmatmul.mubr.f32.gmra.mrb[0].mxu0 %v50
    %v151 = vpop.f32.mrb[0].mxu0
    %v152 = vadd.f32 0.0, %v151
    %v153 = vpop.f32.mrb[0].mxu0
    %154 = vdwg.mxu0
    %v155 = vadd.f32 %v52, %v152
    %156 = vst [vmem:[#allocation2] sm:$0xff] %v155
    // Predicated region
    $region26: #{tpu_custom_call.1} parent=1 // pred_check
      %p157 = pneg %p41
    $region27: #{tpu_custom_call.1} parent=1 // pred_check_branch
      %159 = sbr.rel (%p157) target = $region29
    $region28: #{tpu_custom_call.1} parent=1 // pred_region
      %v160 = vld [vmem:[#allocation2] sm:$0xff]
      %v161 = vld [vmem:[%s2] sm:$0x1]
      %v163 = vlaneseq
      %v164 = vshrl.u32 %v163, 7
      %v165 = vsub.s32 0, %v164
      %v166 = vrot.slane %v161, %v165
      %v168 = vadd.f32 %v160, %v166
      %vm169 = vcmp.gt.f32.partialorder %v168, 0.0
      %v170 = vmul.f32 %v168, %v168
      %v171 = vsub.f32 %v170, 0.5
      %v172 = vmul.f32 %v168, 1.442695
      %v173 = vpow.pop %v172
      %v174 = vadd.f32 %v173, 1.0
      %v175 = vrcp.pop %v174
      %v176 = vmul.f32 1.0, %v175
      %v177 = vsub.f32 %v176, 1.0
      %v178 = vsel %vm169, %v171, %v177
      %179 = vst [vmem:[#allocation8] sm:$0xff] %v178
    $region29: #{tpu_custom_call.1} parent=1 // pred_fallthru
      _
    // Predicated region
    $region30: #{tpu_custom_call.1} parent=1 // pred_check
      _
    $region31: #{tpu_custom_call.1} parent=1 // pred_check_branch
      %181 = sbr.rel (0) target = $region33
    $region32: #{tpu_custom_call.1} parent=1 // pred_region
      %s183 = ssub.s32 128, 128
      %184 = vsyncadd [#allocation5], %s183
      %s186 = sshll.u32 [#allocation8], 4
      %s187 = int_to_ptr.vmem [resolvable:$true] %s186
      %189 = dma.vmem_to_hbm [thread:$0]  %s187, 128, %s3, [#allocation5]
    $region33: #{tpu_custom_call.1} parent=1 // pred_fallthru
      _
    // Predicated region
    $region34: #{tpu_custom_call.1} parent=1 // pred_check
      _
    $region35: #{tpu_custom_call.1} parent=1 // pred_check_branch
      %191 = sbr.rel (0) target = $region37
    $region36: #{tpu_custom_call.1} parent=1 // pred_region
      %192 = dma.done [#allocation5], 128
    $region37: #{tpu_custom_call.1} parent=1 // pred_fallthru
      _
    %193 = vsyncpa [#allocation4], 1
    %194 = vsyncpa [#allocation7], 1
    %195 = vsyncpa [#allocation5], 1

</llo_original>
